<compile_context>
chip_gen: v7x
topology: tpu7x:2x2x1
jax: 0.10.0
libtpu: 0.0.40
codegen_flags: <defaults>
</compile_context>

<pallas_src>
import functools

import jax
import jax.numpy as jnp
from jax.experimental import pallas as pl
from jax.experimental.pallas import tpu as pltpu


def _bert_output_kernel(hs_ref, res_ref, w_ref, p_ref, o_ref, *, eps):
    # Dense on the MXU: operands in their stored (bf16) dtype, accumulate in f32.
    dense = jnp.dot(hs_ref[...], w_ref[...], preferred_element_type=jnp.float32)

    # Dropout: module is evaluated in inference mode -> identity.
    # TODO(synk): training-mode dropout (pltpu.prng_random_bits mask) not wired in.

    bias = p_ref[0:1, :]   # f32 (1, N)
    gamma = p_ref[1:2, :]
    beta = p_ref[2:3, :]

    # Residual add + LayerNorm over the hidden (lane) axis; statistics in f32.
    x = dense + bias + res_ref[...].astype(jnp.float32)
    mean = jnp.mean(x, axis=-1, keepdims=True)
    mean_sq = jnp.mean(x * x, axis=-1, keepdims=True)
    var = jnp.maximum(mean_sq - mean * mean, 0.0)   # guard tiny negative from fp error
    inv = jax.lax.rsqrt(var + eps)
    o_ref[...] = ((x - mean) * inv * gamma + beta).astype(o_ref.dtype)


def bert_output(hidden_states, input_tensor, weight, bias, gamma, beta,
                *, eps=1e-12, tile_m=512, compute_dtype=jnp.bfloat16):
    """Fused BertOutput forward.

    hidden_states: [M, K], input_tensor: [M, N], weight: [K, N] (torch weight.T),
    bias/gamma/beta: [N]. Output: [M, N] in hidden_states' original dtype.

    tile_m guidance:
      * v6e / v5e (128 MiB VMEM, HBM-bound with bf16): tile_m 512-1024.
      * v7x (64 MiB VMEM, 2 TCs): tile_m <= 512 and keep grid_m = cdiv(M, tile_m) >= 8
        so each TensorCore runs >= 4 pipelined steps and the DMA pipeline fills.
    compute_dtype: dtype fed to the MXU (bf16 default; set None to keep input dtype).
    """
    M, K = hidden_states.shape
    N = input_tensor.shape[-1]
    out_dtype = hidden_states.dtype   # output in the caller's original dtype

    # Feed the MXU bf16 (also halves HBM traffic of hs / weight / residual). In a real
    # model the activations would already be bf16 and these casts are no-ops.
    if compute_dtype is not None:
        hidden_states = hidden_states.astype(compute_dtype)
        input_tensor = input_tensor.astype(compute_dtype)
        weight = weight.astype(compute_dtype)

    # Pack the small per-feature params into one resident f32 block (single DMA, no
    # per-step casts in the kernel).
    params = jnp.stack([bias, gamma, beta]).astype(jnp.float32)   # (3, N)

    # Clamp the tile to the (8-rounded) token count; the final partial block (when
    # tile_m doesn't divide M) is handled by Pallas' block padding + masked store,
    # so no jnp.pad HBM round-trip is needed.
    tile_m = max(8, min(tile_m, pl.cdiv(M, 8) * 8))
    grid_m = pl.cdiv(M, tile_m)

    # VMEM budget: double-buffered token tiles + (conservatively double-counted)
    # resident weight + padded param block + slack. Capped at 48 MiB for v7x headroom.
    vmem_need = (2 * K * N * weight.dtype.itemsize
                 + 2 * tile_m * K * hidden_states.dtype.itemsize
                 + 2 * tile_m * N * input_tensor.dtype.itemsize
                 + 2 * tile_m * N * out_dtype.itemsize
                 + 2 * 8 * N * 4)
    vmem_limit = int(min(max(vmem_need + (6 << 20), 16 << 20), 48 << 20))

    kernel = functools.partial(_bert_output_kernel, eps=eps)

    return pl.pallas_call(
        kernel,
        out_shape=jax.ShapeDtypeStruct((M, N), out_dtype),
        grid_spec=pltpu.PrefetchScalarGridSpec(
            num_scalar_prefetch=0,
            grid=(grid_m,),
            in_specs=[
                pl.BlockSpec((tile_m, K), lambda i: (i, 0)),   # hidden_states tile
                pl.BlockSpec((tile_m, N), lambda i: (i, 0)),   # residual tile
                pl.BlockSpec((K, N), lambda i: (0, 0)),        # dense weight (grid-invariant)
                pl.BlockSpec((3, N), lambda i: (0, 0)),        # packed bias/gamma/beta (f32)
            ],
            out_specs=pl.BlockSpec((tile_m, N), lambda i: (i, 0)),
        ),
        compiler_params=pltpu.CompilerParams(
            dimension_semantics=("parallel",),
            vmem_limit_bytes=vmem_limit,
        ),
    )(hidden_states, input_tensor, weight, params)


def bert_output_ref(hidden_states, input_tensor, weight, bias, gamma, beta,
                    eps=1e-12, compute_dtype=jnp.bfloat16):
    """Pure-JAX reference with the same operand-precision choices as the kernel."""
    out_dtype = hidden_states.dtype
    if compute_dtype is not None:
        hidden_states = hidden_states.astype(compute_dtype)
        input_tensor = input_tensor.astype(compute_dtype)
        weight = weight.astype(compute_dtype)
    x = jnp.dot(hidden_states, weight, preferred_element_type=jnp.float32)
    x = x + bias.astype(jnp.float32)
    x = x + input_tensor.astype(jnp.float32)
    mean = jnp.mean(x, axis=-1, keepdims=True)
    var = jnp.mean((x - mean) ** 2, axis=-1, keepdims=True)
    out = (x - mean) / jnp.sqrt(var + eps) * gamma.astype(jnp.float32) + beta.astype(jnp.float32)
    return out.astype(out_dtype)


if __name__ == "__main__":
    # Small, module-consistent shapes: batch=2, seq=8, intermediate=64, hidden=32.
    B, S, I, H = 2, 8, 64, 32
    key = jax.random.PRNGKey(0)
    k1, k2, k3, k4 = jax.random.split(key, 4)

    hidden_states = jax.random.normal(k1, (B, S, I), dtype=jnp.float32)
    input_tensor = jax.random.normal(k2, (B, S, H), dtype=jnp.float32)

    # nn.Linear(I, H) params: weight stored as [I, H] = torch weight.T
    bound = 1.0 / (I ** 0.5)
    weight = jax.random.uniform(k3, (I, H), minval=-bound, maxval=bound, dtype=jnp.float32)
    bias = jax.random.uniform(k4, (H,), minval=-bound, maxval=bound, dtype=jnp.float32)
    # LayerNorm params (default init).
    gamma = jnp.ones((H,), dtype=jnp.float32)
    beta = jnp.zeros((H,), dtype=jnp.float32)

    hs2d = hidden_states.reshape(B * S, I)
    res2d = input_tensor.reshape(B * S, H)

    out = jax.block_until_ready(bert_output(hs2d, res2d, weight, bias, gamma, beta))
    ref = bert_output_ref(hs2d, res2d, weight, bias, gamma, beta)
    assert out.shape == (B * S, H) and out.dtype == hs2d.dtype
    assert jnp.allclose(out, ref, atol=2e-3, rtol=2e-3), "mismatch vs reference"

    # Ragged-M path: token count not a multiple of the tile (handled in-kernel, no jnp.pad).
    M2 = 14
    out_r = jax.block_until_ready(
        bert_output(hs2d[:M2], res2d[:M2], weight, bias, gamma, beta, tile_m=8))
    ref_r = bert_output_ref(hs2d[:M2], res2d[:M2], weight, bias, gamma, beta)
    assert out_r.shape == (M2, H)
    assert jnp.allclose(out_r, ref_r, atol=2e-3, rtol=2e-3), "mismatch vs reference (ragged M)"

    print("KERNEL_OK")
</pallas_src>

<mosaic_0001>
module attributes {stable_mosaic.version = 11 : i64} {
  func.func @_bert_output_kernel(%arg0: i32, %arg1: memref<16x64xbf16, #tpu.memory_space<vmem>>, %arg2: memref<16x32xbf16, #tpu.memory_space<vmem>>, %arg3: memref<64x32xbf16, #tpu.memory_space<vmem>>, %arg4: memref<3x32xf32, #tpu.memory_space<vmem>>, %arg5: memref<16x32xf32, #tpu.memory_space<vmem>>) attributes {dimension_semantics = [#tpu.dimension_semantics<parallel>], iteration_bounds = array<i64: 1>, scalar_prefetch = 0 : i64, scratch_operands = 0 : i64, tpu.core_type = #tpu.core_type<tc>, window_params = [{transform_indices = @transform_0, window_bounds = array<i64: 16, 64>}, {transform_indices = @transform_1, window_bounds = array<i64: 16, 32>}, {pipeline_mode = #tpu.pipeline_mode<synchronous>, transform_indices = @transform_2, window_bounds = array<i64: 64, 32>}, {pipeline_mode = #tpu.pipeline_mode<synchronous>, transform_indices = @transform_3, window_bounds = array<i64: 3, 32>}, {transform_indices = @transform_4, window_bounds = array<i64: 16, 32>}]} {
    %c0 = arith.constant 0 : index
    %c0_0 = arith.constant 0 : index
    %0 = vector.load %arg1[%c0, %c0_0] : memref<16x64xbf16, #tpu.memory_space<vmem>>, vector<16x64xbf16>
    %c0_1 = arith.constant 0 : index
    %c0_2 = arith.constant 0 : index
    %1 = vector.load %arg3[%c0_1, %c0_2] : memref<64x32xbf16, #tpu.memory_space<vmem>>, vector<64x32xbf16>
    %cst = arith.constant dense<0.000000e+00> : vector<16x32xf32>
    %2 = tpu.matmul %0, %1, %cst {dimension_numbers = #tpu.dot_dimension_numbers<[1], [0], [0], [1], [0, 0, 1, 1], [], []>} : vector<16x64xbf16>, vector<64x32xbf16>, vector<16x32xf32> -> vector<16x32xf32>
    %c0_3 = arith.constant 0 : index
    %c0_4 = arith.constant 0 : index
    %3 = vector.load %arg4[%c0_3, %c0_4] : memref<3x32xf32, #tpu.memory_space<vmem>>, vector<1x32xf32>
    %c1 = arith.constant 1 : index
    %c0_5 = arith.constant 0 : index
    %4 = vector.load %arg4[%c1, %c0_5] : memref<3x32xf32, #tpu.memory_space<vmem>>, vector<1x32xf32>
    %c2 = arith.constant 2 : index
    %c0_6 = arith.constant 0 : index
    %5 = vector.load %arg4[%c2, %c0_6] : memref<3x32xf32, #tpu.memory_space<vmem>>, vector<1x32xf32>
    %6 = vector.broadcast %3 : vector<1x32xf32> to vector<16x32xf32>
    %7 = arith.addf %2, %6 : vector<16x32xf32>
    %c0_7 = arith.constant 0 : index
    %c0_8 = arith.constant 0 : index
    %8 = vector.load %arg2[%c0_7, %c0_8] : memref<16x32xbf16, #tpu.memory_space<vmem>>, vector<16x32xbf16>
    %9 = arith.extf %8 : vector<16x32xbf16> to vector<16x32xf32>
    %10 = arith.addf %7, %9 : vector<16x32xf32>
    %cst_9 = arith.constant dense<0.000000e+00> : vector<16xf32>
    %11 = vector.multi_reduction <add>, %10, %cst_9 [1] : vector<16x32xf32> to vector<16xf32>
    %12 = vector.shape_cast %11 : vector<16xf32> to vector<16x1xf32>
    %cst_10 = arith.constant 3.200000e+01 : f32
    %13 = vector.broadcast %cst_10 : f32 to vector<16x1xf32>
    %14 = arith.divf %12, %13 : vector<16x1xf32>
    %15 = arith.mulf %10, %10 : vector<16x32xf32>
    %cst_11 = arith.constant dense<0.000000e+00> : vector<16xf32>
    %16 = vector.multi_reduction <add>, %15, %cst_11 [1] : vector<16x32xf32> to vector<16xf32>
    %17 = vector.shape_cast %16 : vector<16xf32> to vector<16x1xf32>
    %cst_12 = arith.constant 3.200000e+01 : f32
    %18 = vector.broadcast %cst_12 : f32 to vector<16x1xf32>
    %19 = arith.divf %17, %18 : vector<16x1xf32>
    %20 = arith.mulf %14, %14 : vector<16x1xf32>
    %21 = arith.subf %19, %20 : vector<16x1xf32>
    %cst_13 = arith.constant 0.000000e+00 : f32
    %22 = vector.broadcast %cst_13 : f32 to vector<16x1xf32>
    %23 = arith.maximumf %21, %22 : vector<16x1xf32>
    %cst_14 = arith.constant 9.99999996E-13 : f32
    %24 = vector.broadcast %cst_14 : f32 to vector<16x1xf32>
    %25 = arith.addf %23, %24 : vector<16x1xf32>
    %26 = math.rsqrt %25 : vector<16x1xf32>
    %27 = vector.broadcast %14 : vector<16x1xf32> to vector<16x32xf32>
    %28 = arith.subf %10, %27 : vector<16x32xf32>
    %29 = vector.broadcast %26 : vector<16x1xf32> to vector<16x32xf32>
    %30 = arith.mulf %28, %29 : vector<16x32xf32>
    %31 = vector.broadcast %4 : vector<1x32xf32> to vector<16x32xf32>
    %32 = arith.mulf %30, %31 : vector<16x32xf32>
    %33 = vector.broadcast %5 : vector<1x32xf32> to vector<16x32xf32>
    %34 = arith.addf %32, %33 : vector<16x32xf32>
    %c0_15 = arith.constant 0 : index
    %c0_16 = arith.constant 0 : index
    %35 = vector.load %arg5[%c0_15, %c0_16] : memref<16x32xf32, #tpu.memory_space<vmem>>, vector<16x32xf32>
    tpu.vector_store %arg5[%c0_15, %c0_16], %34 {strides = array<i32>} : memref<16x32xf32, #tpu.memory_space<vmem>>, vector<16x32xf32>,
    return
  }
  func.func @transform_0(%arg0: i32) -> (i32, i32) {
    %c0_i32 = arith.constant 0 : i32
    %c0_i32_0 = arith.constant 0 : i32
    return %arg0, %c0_i32 : i32, i32
  }
  func.func @transform_1(%arg0: i32) -> (i32, i32) {
    %c0_i32 = arith.constant 0 : i32
    %c0_i32_0 = arith.constant 0 : i32
    return %arg0, %c0_i32 : i32, i32
  }
  func.func @transform_2(%arg0: i32) -> (i32, i32) {
    %c0_i32 = arith.constant 0 : i32
    %c0_i32_0 = arith.constant 0 : i32
    %c0_i32_1 = arith.constant 0 : i32
    return %c0_i32, %c0_i32_0 : i32, i32
  }
  func.func @transform_3(%arg0: i32) -> (i32, i32) {
    %c0_i32 = arith.constant 0 : i32
    %c0_i32_0 = arith.constant 0 : i32
    %c0_i32_1 = arith.constant 0 : i32
    return %c0_i32, %c0_i32_0 : i32, i32
  }
  func.func @transform_4(%arg0: i32) -> (i32, i32) {
    %c0_i32 = arith.constant 0 : i32
    %c0_i32_0 = arith.constant 0 : i32
    return %arg0, %c0_i32 : i32, i32
  }
}

</mosaic_0001>

<llo_original>
// kernel: tpu_custom_call.1
$region0: #{tpu_custom_call.1}
  #allocation0 [shape = 'u32[]', space=smem, size = 0x4, offset = 0x4, fixed_abs, tag = 'smem constant byte address 0x4 - core index']
  #allocation1 [shape = 'u32[144,128]{1,0:T(1,128)}', space=vmem, size = 0x12000, scoped, tag = 'internal scratch']
  %s0 = inlined_call_operand.vmem [shape: bf16[16,64], index: 0, kind: input, shape index: {}]
  %s1 = inlined_call_operand.vmem [shape: bf16[16,32], index: 1, kind: input, shape index: {}]
  %s2 = inlined_call_operand.vmem [shape: bf16[64,32], index: 2, kind: input, shape index: {}]
  %s3 = inlined_call_operand.vmem [shape: f32[3,32], index: 3, kind: input, shape index: {}]
  %s4 = inlined_call_operand.hbm [shape: f32[16,32], index: 4, kind: output, shape index: {}]
  %s5 = sld [smem:[#allocation0]]
  $region26: #{tpu_custom_call.1} parent=0
    _
  %s7 = ssub.s32 1, %s5
  %s8 = scalar_select 0, %s7, %s5
  $region1: #{tpu_custom_call.1} parent=0
    #allocation2 [shape = 'u8[8192]{0}', space=vmem, size = 0x2000, scoped, tag = 'output window, operand 0, single buffered']
    #allocation3 [shape = 's32[1]{0}', space=sflag, size = 0x4, scoped, tag = 'scoped memory for tpu_custom_call.1']
    %9 = vsyncpa [#allocation3], 0
    // Predicated region
    $region2: #{tpu_custom_call.1} parent=1 // pred_check
      _
    $region3: #{tpu_custom_call.1} parent=1 // pred_check_branch
      %11 = sbr.rel (0) target = $region5
    $region4: #{tpu_custom_call.1} parent=1 // pred_region
      _
    $region5: #{tpu_custom_call.1} parent=1 // pred_fallthru
      _
    // Predicated region
    $region6: #{tpu_custom_call.1} parent=1 // pred_check
      _
    $region7: #{tpu_custom_call.1} parent=1 // pred_check_branch
      %13 = sbr.rel (0) target = $region9
    $region8: #{tpu_custom_call.1} parent=1 // pred_region
      _
    $region9: #{tpu_custom_call.1} parent=1 // pred_fallthru
      _
    // Predicated region
    $region10: #{tpu_custom_call.1} parent=1 // pred_check
      _
    $region11: #{tpu_custom_call.1} parent=1 // pred_check_branch
      %15 = sbr.rel (0) target = $region13
    $region12: #{tpu_custom_call.1} parent=1 // pred_region
      _
    $region13: #{tpu_custom_call.1} parent=1 // pred_fallthru
      _
    // Predicated region
    $region14: #{tpu_custom_call.1} parent=1 // pred_check
      _
    $region15: #{tpu_custom_call.1} parent=1 // pred_check_branch
      %17 = sbr.rel (0) target = $region17
    $region16: #{tpu_custom_call.1} parent=1 // pred_region
      _
    $region17: #{tpu_custom_call.1} parent=1 // pred_fallthru
      _
    %v19 = vld [vmem:[%s0] sm:$0xf]
    %v20 = vld [vmem:[%s0 + $0x4] sm:$0xf]
    %v21 = vld [vmem:[%s2] sm:$0xf]
    %v22 = vld [vmem:[%s2 + $0x4] sm:$0xf]
    %v23 = vld [vmem:[%s2 + $0x8] sm:$0xf]
    %v24 = vld [vmem:[%s2 + $0xc] sm:$0xf]
    %v25 = vld [vmem:[%s2 + $0x10] sm:$0xf]
    %v26 = vld [vmem:[%s2 + $0x14] sm:$0xf]
    %v27 = vld [vmem:[%s2 + $0x18] sm:$0xf]
    %v28 = vld [vmem:[%s2 + $0x1c] sm:$0xf]
    %v29 = vld [vmem:[%s3] sm:$0x1]
    %v30 = vld [vmem:[%s3 + $0x1] sm:$0x1]
    %v31 = vld [vmem:[%s3 + $0x2] sm:$0x1]
    %v32 = vlaneseq
    %v33 = vshrl.u32 %v32, 7
    %v34 = vsub.s32 0, %v33
    %v35 = vrot.slane %v29, %v34
    %v38 = vunpack.c.l.b16 %v19
    %v39 = vunpack.c.l.b16 %v20
    %v40 = vpack.c.b16 %v39, %v38
    %v49 = vunpack.c.l.b16 %v21
    %v50 = vunpack.c.l.b16 %v22
    %v51 = vunpack.c.l.b16 %v23
    %v52 = vunpack.c.l.b16 %v24
    %v53 = vunpack.c.l.b16 %v25
    %v54 = vunpack.c.l.b16 %v26
    %v55 = vunpack.c.l.b16 %v27
    %v56 = vunpack.c.l.b16 %v28
    %v57 = vpack.c.b16 %v50, %v49
    %v58 = vpack.c.b16 %v52, %v51
    %v59 = vpack.c.b16 %v54, %v53
    %v60 = vpack.c.b16 %v56, %v55
    %vm65 = vcmask 523264
    %v67 = vsel %vm65, %v40, 0
    %69 = vmatprep.subr.bf16.mxu0 0
    %70 = vmatpush1.bf16.msra.mxu0 %v57
    %71 = vmatprep.subr.bf16.mxu0 0
    %72 = vmatpush1.bf16.msra.mxu0 %v58
    %73 = vmatprep.subr.bf16.mxu0 0
    %74 = vmatpush1.bf16.msra.mxu0 %v59
    %75 = vmatprep.subr.bf16.mxu0 0
    %76 = vmatpush1.bf16.msra.mxu0 %v60
    %77 = vmatprep.subr.bf16.mxu0 0
    %78 = vmatpush1.bf16.msra.mxu0 0
    %79 = vmatprep.subr.bf16.mxu0 0
    %80 = vmatpush1.bf16.msra.mxu0 0
    %81 = vmatprep.subr.bf16.mxu0 0
    %82 = vmatpush1.bf16.msra.mxu0 0
    %83 = vmatprep.subr.bf16.mxu0 0
    %84 = vmatpush1.bf16.msra.mxu0 0
    %85 = vmatprep.subr.bf16.mxu0 0
    %86 = vmatpush1.bf16.msra.mxu0 0
    %87 = vmatprep.subr.bf16.mxu0 0
    %88 = vmatpush1.bf16.msra.mxu0 0
    %89 = vmatprep.subr.bf16.mxu0 0
    %90 = vmatpush1.bf16.msra.mxu0 0
    %91 = vmatprep.subr.bf16.mxu0 0
    %92 = vmatpush1.bf16.msra.mxu0 0
    %93 = vmatprep.subr.bf16.mxu0 0
    %94 = vmatpush1.bf16.msra.mxu0 0
    %95 = vmatprep.subr.bf16.mxu0 0
    %96 = vmatpush1.bf16.msra.mxu0 0
    %97 = vmatprep.subr.bf16.mxu0 0
    %98 = vmatpush1.bf16.msra.mxu0 0
    %99 = vmatprep.subr.bf16.mxu0 0
    %100 = vmatpush1.bf16.msra.mxu0 0
    %101 = vmatprep.mubr.bf16.mxu0 0
    %102 = vmatmul.mubr.bf16.gmra.mrb[0].mxu0 %v67
    %v103 = vpop.f32.mrb[0].mxu0
    %v104 = vadd.f32 %v35, %v103
    %v105 = vpop.f32.mrb[0].mxu0
    %v106 = vpop.f32.mrb[0].mxu0
    %v107 = vadd.f32 %v35, %v106
    %v108 = vpop.f32.mrb[0].mxu0
    %109 = vdwg.mxu0
    %v110 = vld [vmem:[%s1] sm:$0xf]
    %v111 = vld [vmem:[%s1 + $0x4] sm:$0xf]
    %v112 = vunpack.c.l.bf16 %v110
    %v113 = vunpack.c.l.bf16 %v111
    %v114 = vadd.f32 %v104, %v112
    %v115 = vadd.f32 %v107, %v113
    %vm116 = vcmask 261120
    %v117 = vsel %vm116, %v114, 0.0
    %118 = vadd.xlane.f32.xlu0 %v117
    %v119 = vpop.xlane.xlu0 %118
    %v120 = vsel %vm116, %v115, 0.0
    %121 = vadd.xlane.f32.xlu0 %v120
    %v122 = vpop.xlane.xlu0 %121
    %v123 = vrcp.pop 32.0
    %v124 = vmul.f32 %v119, %v123
    %v125 = vmul.f32 %v122, %v123
    %v126 = vmul.f32 %v114, %v114
    %v127 = vmul.f32 %v115, %v115
    %v128 = vsel %vm116, %v126, 0.0
    %129 = vadd.xlane.f32.xlu0 %v128
    %v130 = vpop.xlane.xlu0 %129
    %v131 = vsel %vm116, %v127, 0.0
    %132 = vadd.xlane.f32.xlu0 %v131
    %v133 = vpop.xlane.xlu0 %132
    %v134 = vmul.f32 %v130, %v123
    %v135 = vmul.f32 %v133, %v123
    %v136 = vmul.f32 %v124, %v124
    %v137 = vmul.f32 %v125, %v125
    %v138 = vsub.f32 %v134, %v136
    %v139 = vsub.f32 %v135, %v137
    %v140 = vmax.f32 %v138, 0.0
    %v141 = vmax.f32 %v139, 0.0
    %v142 = vadd.f32 %v140, 1e-12
    %v143 = vadd.f32 %v141, 1e-12
    %v144 = vrsqrt.pop %v142
    %v145 = vrsqrt.pop %v143
    %v146 = vsub.f32 %v114, %v124
    %v147 = vsub.f32 %v115, %v125
    %v148 = vmul.f32 %v146, %v144
    %v149 = vmul.f32 %v147, %v145
    %v150 = vlaneseq
    %v151 = vshrl.u32 %v150, 7
    %v152 = vsub.s32 0, %v151
    %v153 = vrot.slane %v30, %v152
    %v154 = vmul.f32 %v148, %v153
    %v155 = vmul.f32 %v149, %v153
    %v156 = vlaneseq
    %v157 = vshrl.u32 %v156, 7
    %v158 = vsub.s32 0, %v157
    %v159 = vrot.slane %v31, %v158
    %v160 = vadd.f32 %v154, %v159
    %v161 = vadd.f32 %v155, %v159
    %162 = vst.msk [vmem:[#allocation2] sm:$0xff] %vm116, %v160
    %163 = vst.msk [vmem:[#allocation2 + $0x8] sm:$0xff] %vm116, %v161
    // Predicated region
    $region18: #{tpu_custom_call.1} parent=1 // pred_check
      _
    $region19: #{tpu_custom_call.1} parent=1 // pred_check_branch
      %165 = sbr.rel (0) target = $region21
    $region20: #{tpu_custom_call.1} parent=1 // pred_region
      %s167 = ssub.s32 256, 256
      %168 = vsyncadd [#allocation3], %s167
      %s169 = sshll.u32 [#allocation2], 4
      %s170 = int_to_ptr.vmem [resolvable:$true] %s169
      %175 = dma.vmem_to_hbm [thread:$0]  %s170, 256, %s4, [#allocation3], 128, 128, 8
    $region21: #{tpu_custom_call.1} parent=1 // pred_fallthru
      _
    // Predicated region
    $region22: #{tpu_custom_call.1} parent=1 // pred_check
      _
    $region23: #{tpu_custom_call.1} parent=1 // pred_check_branch
      %177 = sbr.rel (0) target = $region25
    $region24: #{tpu_custom_call.1} parent=1 // pred_region
      %178 = dma.done [#allocation3], 256
    $region25: #{tpu_custom_call.1} parent=1 // pred_fallthru
      _
    %179 = vsyncpa [#allocation3], 1

</llo_original>
